<compile_context>
chip_gen: v7x
topology: tpu7x:2x2x1
jax: 0.10.0
libtpu: 0.0.40
codegen_flags: <defaults>
</compile_context>

<pallas_src>
import functools
import math

import jax
import jax.numpy as jnp
from jax.experimental import pallas as pl
from jax.experimental.pallas import tpu as pltpu


# ---------------------------------------------------------------------------
# Fused pooling kernel: one pass over x -> avg & unbiased std for all three
# MCA branches.
# ---------------------------------------------------------------------------
def _fused_pool_kernel(x_ref, out_c_ref, out_h_ref, out_w_ref,
                       c_s, c_q, w_s, w_q, *,
                       inv_nc, inv_nc1, inv_nh, inv_nh1, inv_nw, inv_nw1):
    hi = pl.program_id(1)

    @pl.when(hi == 0)
    def _init():
        c_s[...] = jnp.zeros_like(c_s)
        c_q[...] = jnp.zeros_like(c_q)
        w_s[...] = jnp.zeros_like(w_s)
        w_q[...] = jnp.zeros_like(w_q)

    x = x_ref[...].astype(jnp.float32)                 # (C, th, W)
    xsq = x * x

    # Channel-reduced plane: adds over the leading dim -> pure VPU work.
    t_s = jnp.sum(x, axis=0)                           # (th, W)
    t_q = jnp.sum(xsq, axis=0)

    # per-(b, h): block holds full C and full W -> complete; write directly.
    h_sum = jnp.sum(t_s, axis=1, keepdims=True)        # (th, 1)
    h_sq = jnp.sum(t_q, axis=1, keepdims=True)
    h_mean = h_sum * inv_nh
    h_var = jnp.maximum((h_sq - h_sum * h_mean) * inv_nh1, 0.0)
    out_h_ref[:, 0:1] = h_mean
    out_h_ref[:, 1:2] = jnp.sqrt(h_var)

    # per-(b, w): accumulate over h tiles.
    w_s[...] += jnp.sum(t_s, axis=0, keepdims=True)    # (1, W)
    w_q[...] += jnp.sum(t_q, axis=0, keepdims=True)

    # per-(b, c): accumulate over h tiles (keepdims -> no rank-changing
    # relayouts inside the kernel body).
    r_s = jnp.sum(x, axis=2, keepdims=True)            # (C, th, 1)
    r_q = jnp.sum(xsq, axis=2, keepdims=True)
    c_s[...] += jnp.sum(r_s, axis=1, keepdims=True)    # (C, 1, 1)
    c_q[...] += jnp.sum(r_q, axis=1, keepdims=True)

    @pl.when(hi == pl.num_programs(1) - 1)
    def _finalize():
        cs = c_s[...]
        c_mean = cs * inv_nc
        c_var = jnp.maximum((c_q[...] - cs * c_mean) * inv_nc1, 0.0)
        out_c_ref[:, :, 0:1] = c_mean
        out_c_ref[:, :, 1:2] = jnp.sqrt(c_var)

        ws = w_s[...]
        w_mean = ws * inv_nw
        w_var = jnp.maximum((w_q[...] - ws * w_mean) * inv_nw1, 0.0)
        out_w_ref[0:1, :] = w_mean
        out_w_ref[1:2, :] = jnp.sqrt(w_var)


# ---------------------------------------------------------------------------
# Tiling helpers
# ---------------------------------------------------------------------------
def _vmem_capacity_bytes():
    try:
        return int(pltpu.get_tpu_info().vmem_capacity_bytes)
    except Exception:
        return 64 << 20                 # conservative default (v7x per-core)


def _choose_h_tile(c, h, w, itemsize, block_budget):
    """Largest h tile whose (c, th, w) block fits block_budget.

    th is either the full extent h (always a legal block dim) or a
    multiple-of-8 divisor of h, so no tail masking / padding copies needed."""
    row_bytes = c * w * itemsize
    if h % 8 != 0 or h * row_bytes <= block_budget:
        # TODO(synk): for pathological shapes (h not 8-divisible AND c*h*w far
        # beyond VMEM) a c-/w-tiled fallback with masked tails would be needed.
        return h
    th = 8
    for d in range(8, h, 8):
        if h % d == 0 and d * row_bytes <= block_budget:
            th = d
    return th


def fused_avg_std_pools(x, *, block_budget=None):
    """x: (b, c, h, w) -> ((mean_c, std_c), (mean_h, std_h), (mean_w, std_w)).

    Each mean/std is (b, dim) float32; std is unbiased (ddof=1), matching
    torch.Tensor.std()."""
    b, c, h, w = x.shape
    itemsize = x.dtype.itemsize
    cap = _vmem_capacity_bytes()

    if block_budget is None:
        # Working set per step ~= 2x native block (double buffering) plus
        # ~2 f32 block-sized temporaries (cast + square) inside the body.
        expand = 2 + 2 * max(1, 4 // itemsize)
        avail = 0.8 * cap - (8 << 20)
        block_budget = int(min(12 << 20, max(2 << 20, avail / expand)))

    th = _choose_h_tile(c, h, w, itemsize, block_budget)
    n_h_tiles = h // th
    blk = c * th * w * itemsize
    blk32 = c * th * w * 4
    vmem_limit = int(min(0.9 * cap, max(32 << 20, 2 * blk + 2 * blk32 + (8 << 20))))

    n_c, n_h, n_w = h * w, c * w, c * h

    def _invm1(n):                      # torch .std() returns NaN when n == 1
        return 1.0 / (n - 1.0) if n > 1 else float("nan")

    kernel = functools.partial(
        _fused_pool_kernel,
        inv_nc=1.0 / n_c, inv_nc1=_invm1(n_c),
        inv_nh=1.0 / n_h, inv_nh1=_invm1(n_h),
        inv_nw=1.0 / n_w, inv_nw1=_invm1(n_w))

    out_c, out_h, out_w = pl.pallas_call(
        kernel,
        out_shape=(jax.ShapeDtypeStruct((b, c, 1, 2), jnp.float32),
                   jax.ShapeDtypeStruct((b, h, 2), jnp.float32),
                   jax.ShapeDtypeStruct((b, 2, w), jnp.float32)),
        grid_spec=pltpu.PrefetchScalarGridSpec(
            num_scalar_prefetch=0,
            grid=(b, n_h_tiles),
            in_specs=[pl.BlockSpec((None, c, th, w),
                                   lambda bi, hi: (bi, 0, hi, 0))],
            out_specs=[pl.BlockSpec((None, c, 1, 2), lambda bi, hi: (bi, 0, 0, 0)),
                       pl.BlockSpec((None, th, 2), lambda bi, hi: (bi, hi, 0)),
                       pl.BlockSpec((None, 2, w), lambda bi, hi: (bi, 0, 0))],
            scratch_shapes=[pltpu.VMEM((c, 1, 1), jnp.float32),
                            pltpu.VMEM((c, 1, 1), jnp.float32),
                            pltpu.VMEM((1, w), jnp.float32),
                            pltpu.VMEM((1, w), jnp.float32)]),
        compiler_params=pltpu.CompilerParams(
            # TODO(synk): when b == 1 the parallel axis has a single step and
            # v7x's second TensorCore idles; a per-core split of the h axis
            # with partial accumulators would recover it.
            dimension_semantics=("parallel", "arbitrary"),
            vmem_limit_bytes=vmem_limit),
    )(x)

    return ((out_c[:, :, 0, 0], out_c[:, :, 0, 1]),
            (out_h[:, :, 0], out_h[:, :, 1]),
            (out_w[:, 0, :], out_w[:, 1, :]))


def _pool_stats_pallas(x):
    return fused_avg_std_pools(x)


def _pool_stats_ref(x):
    xf = x.astype(jnp.float32)
    return ((jnp.mean(xf, axis=(2, 3)), jnp.std(xf, axis=(2, 3), ddof=1)),
            (jnp.mean(xf, axis=(1, 3)), jnp.std(xf, axis=(1, 3), ddof=1)),
            (jnp.mean(xf, axis=(1, 2)), jnp.std(xf, axis=(1, 2), ddof=1)))


# ---------------------------------------------------------------------------
# MCAGate / MCALayer forward (pool_types = ['avg', 'std'])
# ---------------------------------------------------------------------------
def _gate_from_stats(mean, std, conv_w, gate_w):
    """mean/std: (b, d1) pooled stats -> sigmoid gate (b, d1), float32."""
    wt = jax.nn.sigmoid(gate_w.astype(jnp.float32))
    feat = 0.5 * (mean + std) + wt[0] * mean + wt[1] * std            # (b, d1)
    # Conv2d(1, 1, (1, k), padding=(0, (k-1)//2), bias=False) along d1
    k = conv_w.shape[0]
    pad = (k - 1) // 2
    d1 = feat.shape[1]
    featp = jnp.pad(feat, ((0, 0), (pad, pad)))
    conv = sum(conv_w[i].astype(jnp.float32) * featp[:, i:i + d1] for i in range(k))
    return jax.nn.sigmoid(conv)


def mca_layer(x, params, no_spatial=False, pool_stats=_pool_stats_pallas):
    """x: (b, c, h, w). Equivalent to MCALayer(inp=c).forward(x)."""
    (mc, sc), (mh, sh), (mw, sw) = pool_stats(x)
    g_h = _gate_from_stats(mh, sh, params["h_cw"]["conv"], params["h_cw"]["weight"])
    g_w = _gate_from_stats(mw, sw, params["w_hc"]["conv"], params["w_hc"]["weight"])
    if no_spatial:
        gate = 0.5 * (g_h[:, None, :, None] + g_w[:, None, None, :])
    else:
        g_c = _gate_from_stats(mc, sc, params["c_hw"]["conv"],
                               params["c_hw"]["weight"])
        gate = (g_c[:, :, None, None] + g_h[:, None, :, None]
                + g_w[:, None, None, :]) / 3.0
    # x_out = 1/3 * (x*g_c + x*g_h + x*g_w) == x * mean(gates)
    return (x.astype(jnp.float32) * gate).astype(x.dtype)


def mca_layer_ref(x, params, no_spatial=False):
    return mca_layer(x, params, no_spatial, pool_stats=_pool_stats_ref)


def init_mca_params(key, inp):
    lambd, gamma = 1.5, 1.0
    temp = round(abs((math.log2(inp) - gamma) / lambd))
    k_c = temp if temp % 2 else temp - 1
    k_c = max(k_c, 1)                   # guard degenerate tiny-channel case
    ks = jax.random.split(key, 6)

    def gate(kw, kg, ksz):
        return {"conv": 0.3 * jax.random.normal(kw, (ksz,), jnp.float32),
                "weight": jax.random.uniform(kg, (2,), jnp.float32)}

    return {"h_cw": gate(ks[0], ks[1], 3),
            "w_hc": gate(ks[2], ks[3], 3),
            "c_hw": gate(ks[4], ks[5], k_c)}


if __name__ == "__main__":
    key = jax.random.PRNGKey(0)
    kx, kp, kx2, kp2 = jax.random.split(key, 4)

    # ---- primary case (single h tile per image) ---------------------------
    b, c, h, w = 2, 4, 16, 16
    x = jax.random.normal(kx, (b, c, h, w), dtype=jnp.float32)
    params = init_mca_params(kp, c)

    fwd = jax.jit(mca_layer)
    y = fwd(x, params)
    jax.block_until_ready(y)
    y_ref = mca_layer_ref(x, params)
    assert y.shape == x.shape
    err = float(jnp.max(jnp.abs(y.astype(jnp.float32) - y_ref.astype(jnp.float32))))
    assert jnp.allclose(y, y_ref, atol=1e-5, rtol=1e-5), err

    # ---- tiled-reduction case: force th < h so the cross-tile per-c / per-w
    #      accumulators (and non-128 lane widths, odd channel counts) run ----
    b2, c2, h2, w2 = 2, 3, 32, 24
    x2 = jax.random.normal(kx2, (b2, c2, h2, w2), dtype=jnp.float32)
    params2 = init_mca_params(kp2, c2)
    pool_small = functools.partial(fused_avg_std_pools, block_budget=4096)
    fwd2 = jax.jit(functools.partial(mca_layer, pool_stats=pool_small))
    y2 = fwd2(x2, params2)
    jax.block_until_ready(y2)
    y2_ref = mca_layer_ref(x2, params2)
    err2 = float(jnp.max(jnp.abs(y2 - y2_ref)))
    assert jnp.allclose(y2, y2_ref, atol=1e-5, rtol=1e-5), err2

    # ---- bf16 input smoke test (native-dtype wire, f32 accumulation) ------
    x3 = x.astype(jnp.bfloat16)
    y3 = fwd(x3, params)
    jax.block_until_ready(y3)
    y3_ref = mca_layer_ref(x3, params)
    assert y3.dtype == jnp.bfloat16
    assert jnp.allclose(y3.astype(jnp.float32), y3_ref.astype(jnp.float32),
                        atol=1e-2, rtol=1e-2)

    print("KERNEL_OK")
</pallas_src>

<mosaic_0001>
module attributes {stable_mosaic.version = 11 : i64} {
  func.func @_fused_pool_kernel(%arg0: i32, %arg1: i32, %arg2: memref<1x4x16x16xf32, #tpu.memory_space<vmem>>, %arg3: memref<1x4x1x2xf32, #tpu.memory_space<vmem>>, %arg4: memref<1x16x2xf32, #tpu.memory_space<vmem>>, %arg5: memref<1x2x16xf32, #tpu.memory_space<vmem>>, %arg6: memref<4x1x1xf32, #tpu.memory_space<vmem>>, %arg7: memref<4x1x1xf32, #tpu.memory_space<vmem>>, %arg8: memref<1x16xf32, #tpu.memory_space<vmem>>, %arg9: memref<1x16xf32, #tpu.memory_space<vmem>>) attributes {dimension_semantics = [#tpu.dimension_semantics<parallel>, #tpu.dimension_semantics<arbitrary>], iteration_bounds = array<i64: 2, 1>, scalar_prefetch = 0 : i64, scratch_operands = 4 : i64, tpu.core_type = #tpu.core_type<tc>, window_params = [{transform_indices = @transform_0, window_bounds = array<i64: 1, 4, 16, 16>}, {transform_indices = @transform_1, window_bounds = array<i64: 1, 4, 1, 2>}, {transform_indices = @transform_2, window_bounds = array<i64: 1, 16, 2>}, {transform_indices = @transform_3, window_bounds = array<i64: 1, 2, 16>}]} {
    %c0_i32 = arith.constant 0 : i32
    %0 = arith.cmpi eq, %arg1, %c0_i32 : i32
    %1 = arith.extui %0 : i1 to i32
    %c0_i32_0 = arith.constant 0 : i32
    %2 = arith.cmpi ne, %1, %c0_i32_0 : i32
    scf.if %2 {
      %cst_43 = arith.constant 0.000000e+00 : f32
      %54 = vector.broadcast %cst_43 : f32 to vector<4x1x1xf32>
      %c0_44 = arith.constant 0 : index
      %c0_45 = arith.constant 0 : index
      %c0_46 = arith.constant 0 : index
      %55 = vector.load %arg6[%c0_44, %c0_45, %c0_46] : memref<4x1x1xf32, #tpu.memory_space<vmem>>, vector<4x1x1xf32>
      tpu.vector_store %arg6[%c0_44, %c0_45, %c0_46], %54 {strides = array<i32>} : memref<4x1x1xf32, #tpu.memory_space<vmem>>, vector<4x1x1xf32>,
      %cst_47 = arith.constant 0.000000e+00 : f32
      %56 = vector.broadcast %cst_47 : f32 to vector<4x1x1xf32>
      %c0_48 = arith.constant 0 : index
      %c0_49 = arith.constant 0 : index
      %c0_50 = arith.constant 0 : index
      %57 = vector.load %arg7[%c0_48, %c0_49, %c0_50] : memref<4x1x1xf32, #tpu.memory_space<vmem>>, vector<4x1x1xf32>
      tpu.vector_store %arg7[%c0_48, %c0_49, %c0_50], %56 {strides = array<i32>} : memref<4x1x1xf32, #tpu.memory_space<vmem>>, vector<4x1x1xf32>,
      %cst_51 = arith.constant 0.000000e+00 : f32
      %58 = vector.broadcast %cst_51 : f32 to vector<1x16xf32>
      %c0_52 = arith.constant 0 : index
      %c0_53 = arith.constant 0 : index
      %59 = vector.load %arg8[%c0_52, %c0_53] : memref<1x16xf32, #tpu.memory_space<vmem>>, vector<1x16xf32>
      tpu.vector_store %arg8[%c0_52, %c0_53], %58 {strides = array<i32>} : memref<1x16xf32, #tpu.memory_space<vmem>>, vector<1x16xf32>,
      %cst_54 = arith.constant 0.000000e+00 : f32
      %60 = vector.broadcast %cst_54 : f32 to vector<1x16xf32>
      %c0_55 = arith.constant 0 : index
      %c0_56 = arith.constant 0 : index
      %61 = vector.load %arg9[%c0_55, %c0_56] : memref<1x16xf32, #tpu.memory_space<vmem>>, vector<1x16xf32>
      tpu.vector_store %arg9[%c0_55, %c0_56], %60 {strides = array<i32>} : memref<1x16xf32, #tpu.memory_space<vmem>>, vector<1x16xf32>,
    } else {
    }
    %c0 = arith.constant 0 : index
    %c0_1 = arith.constant 0 : index
    %c0_2 = arith.constant 0 : index
    %c0_3 = arith.constant 0 : index
    %3 = vector.load %arg2[%c0, %c0_1, %c0_2, %c0_3] : memref<1x4x16x16xf32, #tpu.memory_space<vmem>>, vector<1x4x16x16xf32>
    %4 = vector.shape_cast %3 : vector<1x4x16x16xf32> to vector<4x16x16xf32>
    %5 = arith.mulf %4, %4 : vector<4x16x16xf32>
    %cst = arith.constant dense<0.000000e+00> : vector<16x16xf32>
    %6 = vector.multi_reduction <add>, %4, %cst [0] : vector<4x16x16xf32> to vector<16x16xf32>
    %cst_4 = arith.constant dense<0.000000e+00> : vector<16x16xf32>
    %7 = vector.multi_reduction <add>, %5, %cst_4 [0] : vector<4x16x16xf32> to vector<16x16xf32>
    %cst_5 = arith.constant dense<0.000000e+00> : vector<16xf32>
    %8 = vector.multi_reduction <add>, %6, %cst_5 [1] : vector<16x16xf32> to vector<16xf32>
    %9 = vector.shape_cast %8 : vector<16xf32> to vector<16x1xf32>
    %cst_6 = arith.constant dense<0.000000e+00> : vector<16xf32>
    %10 = vector.multi_reduction <add>, %7, %cst_6 [1] : vector<16x16xf32> to vector<16xf32>
    %11 = vector.shape_cast %10 : vector<16xf32> to vector<16x1xf32>
    %cst_7 = arith.constant 1.562500e-02 : f32
    %12 = vector.broadcast %cst_7 : f32 to vector<16x1xf32>
    %13 = arith.mulf %9, %12 : vector<16x1xf32>
    %14 = arith.mulf %9, %13 : vector<16x1xf32>
    %15 = arith.subf %11, %14 : vector<16x1xf32>
    %cst_8 = arith.constant 0.0158730168 : f32
    %16 = vector.broadcast %cst_8 : f32 to vector<16x1xf32>
    %17 = arith.mulf %15, %16 : vector<16x1xf32>
    %cst_9 = arith.constant 0.000000e+00 : f32
    %18 = vector.broadcast %cst_9 : f32 to vector<16x1xf32>
    %19 = arith.maximumf %17, %18 : vector<16x1xf32>
    %c0_10 = arith.constant 0 : index
    %c0_11 = arith.constant 0 : index
    %c0_12 = arith.constant 0 : index
    %20 = vector.load %arg4[%c0_10, %c0_11, %c0_12] : memref<1x16x2xf32, #tpu.memory_space<vmem>>, vector<1x16x1xf32>
    %21 = vector.shape_cast %20 : vector<1x16x1xf32> to vector<16x1xf32>
    %22 = vector.shape_cast %13 : vector<16x1xf32> to vector<1x16x1xf32>
    tpu.vector_store %arg4[%c0_10, %c0_11, %c0_12], %22 {strides = array<i32>} : memref<1x16x2xf32, #tpu.memory_space<vmem>>, vector<1x16x1xf32>,
    %23 = math.sqrt %19 : vector<16x1xf32>
    %c0_13 = arith.constant 0 : index
    %c0_14 = arith.constant 0 : index
    %c1 = arith.constant 1 : index
    %24 = vector.load %arg4[%c0_13, %c0_14, %c1] : memref<1x16x2xf32, #tpu.memory_space<vmem>>, vector<1x16x1xf32>
    %25 = vector.shape_cast %24 : vector<1x16x1xf32> to vector<16x1xf32>
    %26 = vector.shape_cast %23 : vector<16x1xf32> to vector<1x16x1xf32>
    tpu.vector_store %arg4[%c0_13, %c0_14, %c1], %26 {strides = array<i32>} : memref<1x16x2xf32, #tpu.memory_space<vmem>>, vector<1x16x1xf32>,
    %c0_15 = arith.constant 0 : index
    %c0_16 = arith.constant 0 : index
    %27 = vector.load %arg8[%c0_15, %c0_16] : memref<1x16xf32, #tpu.memory_space<vmem>>, vector<1x16xf32>
    %cst_17 = arith.constant dense<0.000000e+00> : vector<16xf32>
    %28 = vector.multi_reduction <add>, %6, %cst_17 [0] : vector<16x16xf32> to vector<16xf32>
    %29 = vector.shape_cast %28 : vector<16xf32> to vector<1x16xf32>
    %30 = arith.addf %27, %29 : vector<1x16xf32>
    %c0_18 = arith.constant 0 : index
    %c0_19 = arith.constant 0 : index
    %31 = vector.load %arg8[%c0_18, %c0_19] : memref<1x16xf32, #tpu.memory_space<vmem>>, vector<1x16xf32>
    tpu.vector_store %arg8[%c0_18, %c0_19], %30 {strides = array<i32>} : memref<1x16xf32, #tpu.memory_space<vmem>>, vector<1x16xf32>,
    %c0_20 = arith.constant 0 : index
    %c0_21 = arith.constant 0 : index
    %32 = vector.load %arg9[%c0_20, %c0_21] : memref<1x16xf32, #tpu.memory_space<vmem>>, vector<1x16xf32>
    %cst_22 = arith.constant dense<0.000000e+00> : vector<16xf32>
    %33 = vector.multi_reduction <add>, %7, %cst_22 [0] : vector<16x16xf32> to vector<16xf32>
    %34 = vector.shape_cast %33 : vector<16xf32> to vector<1x16xf32>
    %35 = arith.addf %32, %34 : vector<1x16xf32>
    %c0_23 = arith.constant 0 : index
    %c0_24 = arith.constant 0 : index
    %36 = vector.load %arg9[%c0_23, %c0_24] : memref<1x16xf32, #tpu.memory_space<vmem>>, vector<1x16xf32>
    tpu.vector_store %arg9[%c0_23, %c0_24], %35 {strides = array<i32>} : memref<1x16xf32, #tpu.memory_space<vmem>>, vector<1x16xf32>,
    %cst_25 = arith.constant dense<0.000000e+00> : vector<4x16xf32>
    %37 = vector.multi_reduction <add>, %4, %cst_25 [2] : vector<4x16x16xf32> to vector<4x16xf32>
    %38 = vector.shape_cast %37 : vector<4x16xf32> to vector<4x16x1xf32>
    %cst_26 = arith.constant dense<0.000000e+00> : vector<4x16xf32>
    %39 = vector.multi_reduction <add>, %5, %cst_26 [2] : vector<4x16x16xf32> to vector<4x16xf32>
    %40 = vector.shape_cast %39 : vector<4x16xf32> to vector<4x16x1xf32>
    %c0_27 = arith.constant 0 : index
    %c0_28 = arith.constant 0 : index
    %c0_29 = arith.constant 0 : index
    %41 = vector.load %arg6[%c0_27, %c0_28, %c0_29] : memref<4x1x1xf32, #tpu.memory_space<vmem>>, vector<4x1x1xf32>
    %cst_30 = arith.constant dense<0.000000e+00> : vector<4x1xf32>
    %42 = vector.multi_reduction <add>, %38, %cst_30 [1] : vector<4x16x1xf32> to vector<4x1xf32>
    %43 = vector.shape_cast %42 : vector<4x1xf32> to vector<4x1x1xf32>
    %44 = arith.addf %41, %43 : vector<4x1x1xf32>
    %c0_31 = arith.constant 0 : index
    %c0_32 = arith.constant 0 : index
    %c0_33 = arith.constant 0 : index
    %45 = vector.load %arg6[%c0_31, %c0_32, %c0_33] : memref<4x1x1xf32, #tpu.memory_space<vmem>>, vector<4x1x1xf32>
    tpu.vector_store %arg6[%c0_31, %c0_32, %c0_33], %44 {strides = array<i32>} : memref<4x1x1xf32, #tpu.memory_space<vmem>>, vector<4x1x1xf32>,
    %c0_34 = arith.constant 0 : index
    %c0_35 = arith.constant 0 : index
    %c0_36 = arith.constant 0 : index
    %46 = vector.load %arg7[%c0_34, %c0_35, %c0_36] : memref<4x1x1xf32, #tpu.memory_space<vmem>>, vector<4x1x1xf32>
    %cst_37 = arith.constant dense<0.000000e+00> : vector<4x1xf32>
    %47 = vector.multi_reduction <add>, %40, %cst_37 [1] : vector<4x16x1xf32> to vector<4x1xf32>
    %48 = vector.shape_cast %47 : vector<4x1xf32> to vector<4x1x1xf32>
    %49 = arith.addf %46, %48 : vector<4x1x1xf32>
    %c0_38 = arith.constant 0 : index
    %c0_39 = arith.constant 0 : index
    %c0_40 = arith.constant 0 : index
    %50 = vector.load %arg7[%c0_38, %c0_39, %c0_40] : memref<4x1x1xf32, #tpu.memory_space<vmem>>, vector<4x1x1xf32>
    tpu.vector_store %arg7[%c0_38, %c0_39, %c0_40], %49 {strides = array<i32>} : memref<4x1x1xf32, #tpu.memory_space<vmem>>, vector<4x1x1xf32>,
    %c0_i32_41 = arith.constant 0 : i32
    %51 = arith.cmpi eq, %arg1, %c0_i32_41 : i32
    %52 = arith.extui %51 : i1 to i32
    %c0_i32_42 = arith.constant 0 : i32
    %53 = arith.cmpi ne, %52, %c0_i32_42 : i32
    scf.if %53 {
      %c0_43 = arith.constant 0 : index
      %c0_44 = arith.constant 0 : index
      %c0_45 = arith.constant 0 : index
      %54 = vector.load %arg6[%c0_43, %c0_44, %c0_45] : memref<4x1x1xf32, #tpu.memory_space<vmem>>, vector<4x1x1xf32>
      %cst_46 = arith.constant 3.906250e-03 : f32
      %55 = vector.broadcast %cst_46 : f32 to vector<4x1x1xf32>
      %56 = arith.mulf %54, %55 : vector<4x1x1xf32>
      %c0_47 = arith.constant 0 : index
      %c0_48 = arith.constant 0 : index
      %c0_49 = arith.constant 0 : index
      %57 = vector.load %arg7[%c0_47, %c0_48, %c0_49] : memref<4x1x1xf32, #tpu.memory_space<vmem>>, vector<4x1x1xf32>
      %58 = arith.mulf %54, %56 : vector<4x1x1xf32>
      %59 = arith.subf %57, %58 : vector<4x1x1xf32>
      %cst_50 = arith.constant 0.00392156886 : f32
      %60 = vector.broadcast %cst_50 : f32 to vector<4x1x1xf32>
      %61 = arith.mulf %59, %60 : vector<4x1x1xf32>
      %cst_51 = arith.constant 0.000000e+00 : f32
      %62 = vector.broadcast %cst_51 : f32 to vector<4x1x1xf32>
      %63 = arith.maximumf %61, %62 : vector<4x1x1xf32>
      %c0_52 = arith.constant 0 : index
      %c0_53 = arith.constant 0 : index
      %c0_54 = arith.constant 0 : index
      %c0_55 = arith.constant 0 : index
      %64 = vector.load %arg3[%c0_52, %c0_53, %c0_54, %c0_55] : memref<1x4x1x2xf32, #tpu.memory_space<vmem>>, vector<1x4x1x1xf32>
      %65 = vector.shape_cast %64 : vector<1x4x1x1xf32> to vector<4x1x1xf32>
      %66 = vector.shape_cast %56 : vector<4x1x1xf32> to vector<1x4x1x1xf32>
      tpu.vector_store %arg3[%c0_52, %c0_53, %c0_54, %c0_55], %66 {strides = array<i32>} : memref<1x4x1x2xf32, #tpu.memory_space<vmem>>, vector<1x4x1x1xf32>,
      %67 = math.sqrt %63 : vector<4x1x1xf32>
      %c0_56 = arith.constant 0 : index
      %c0_57 = arith.constant 0 : index
      %c0_58 = arith.constant 0 : index
      %c1_59 = arith.constant 1 : index
      %68 = vector.load %arg3[%c0_56, %c0_57, %c0_58, %c1_59] : memref<1x4x1x2xf32, #tpu.memory_space<vmem>>, vector<1x4x1x1xf32>
      %69 = vector.shape_cast %68 : vector<1x4x1x1xf32> to vector<4x1x1xf32>
      %70 = vector.shape_cast %67 : vector<4x1x1xf32> to vector<1x4x1x1xf32>
      tpu.vector_store %arg3[%c0_56, %c0_57, %c0_58, %c1_59], %70 {strides = array<i32>} : memref<1x4x1x2xf32, #tpu.memory_space<vmem>>, vector<1x4x1x1xf32>,
      %c0_60 = arith.constant 0 : index
      %c0_61 = arith.constant 0 : index
      %71 = vector.load %arg8[%c0_60, %c0_61] : memref<1x16xf32, #tpu.memory_space<vmem>>, vector<1x16xf32>
      %cst_62 = arith.constant 1.562500e-02 : f32
      %72 = vector.broadcast %cst_62 : f32 to vector<1x16xf32>
      %73 = arith.mulf %71, %72 : vector<1x16xf32>
      %c0_63 = arith.constant 0 : index
      %c0_64 = arith.constant 0 : index
      %74 = vector.load %arg9[%c0_63, %c0_64] : memref<1x16xf32, #tpu.memory_space<vmem>>, vector<1x16xf32>
      %75 = arith.mulf %71, %73 : vector<1x16xf32>
      %76 = arith.subf %74, %75 : vector<1x16xf32>
      %cst_65 = arith.constant 0.0158730168 : f32
      %77 = vector.broadcast %cst_65 : f32 to vector<1x16xf32>
      %78 = arith.mulf %76, %77 : vector<1x16xf32>
      %cst_66 = arith.constant 0.000000e+00 : f32
      %79 = vector.broadcast %cst_66 : f32 to vector<1x16xf32>
      %80 = arith.maximumf %78, %79 : vector<1x16xf32>
      %c0_67 = arith.constant 0 : index
      %c0_68 = arith.constant 0 : index
      %c0_69 = arith.constant 0 : index
      %81 = vector.load %arg5[%c0_67, %c0_68, %c0_69] : memref<1x2x16xf32, #tpu.memory_space<vmem>>, vector<1x1x16xf32>
      %82 = vector.shape_cast %81 : vector<1x1x16xf32> to vector<1x16xf32>
      %83 = vector.shape_cast %73 : vector<1x16xf32> to vector<1x1x16xf32>
      tpu.vector_store %arg5[%c0_67, %c0_68, %c0_69], %83 {strides = array<i32>} : memref<1x2x16xf32, #tpu.memory_space<vmem>>, vector<1x1x16xf32>,
      %84 = math.sqrt %80 : vector<1x16xf32>
      %c0_70 = arith.constant 0 : index
      %c1_71 = arith.constant 1 : index
      %c0_72 = arith.constant 0 : index
      %85 = vector.load %arg5[%c0_70, %c1_71, %c0_72] : memref<1x2x16xf32, #tpu.memory_space<vmem>>, vector<1x1x16xf32>
      %86 = vector.shape_cast %85 : vector<1x1x16xf32> to vector<1x16xf32>
      %87 = vector.shape_cast %84 : vector<1x16xf32> to vector<1x1x16xf32>
      tpu.vector_store %arg5[%c0_70, %c1_71, %c0_72], %87 {strides = array<i32>} : memref<1x2x16xf32, #tpu.memory_space<vmem>>, vector<1x1x16xf32>,
    } else {
    }
    return
  }
  func.func @transform_0(%arg0: i32, %arg1: i32) -> (i32, i32, i32, i32) {
    %c0_i32 = arith.constant 0 : i32
    %c0_i32_0 = arith.constant 0 : i32
    %c0_i32_1 = arith.constant 0 : i32
    return %arg0, %c0_i32, %arg1, %c0_i32_0 : i32, i32, i32, i32
  }
  func.func @transform_1(%arg0: i32, %arg1: i32) -> (i32, i32, i32, i32) {
    %c0_i32 = arith.constant 0 : i32
    %c0_i32_0 = arith.constant 0 : i32
    %c0_i32_1 = arith.constant 0 : i32
    %c0_i32_2 = arith.constant 0 : i32
    return %arg0, %c0_i32, %c0_i32_0, %c0_i32_1 : i32, i32, i32, i32
  }
  func.func @transform_2(%arg0: i32, %arg1: i32) -> (i32, i32, i32) {
    %c0_i32 = arith.constant 0 : i32
    %c0_i32_0 = arith.constant 0 : i32
    return %arg0, %arg1, %c0_i32 : i32, i32, i32
  }
  func.func @transform_3(%arg0: i32, %arg1: i32) -> (i32, i32, i32) {
    %c0_i32 = arith.constant 0 : i32
    %c0_i32_0 = arith.constant 0 : i32
    %c0_i32_1 = arith.constant 0 : i32
    return %arg0, %c0_i32, %c0_i32_0 : i32, i32, i32
  }
}

</mosaic_0001>

<llo_original>
// kernel: mca_layer.1
$region0: #{mca_layer.1}
  #allocation0 [shape = 'u32[]', space=smem, size = 0x4, offset = 0x4, fixed_abs, tag = 'smem constant byte address 0x4 - core index']
  #allocation1 [shape = 'u32[144,128]{1,0:T(1,128)}', space=vmem, size = 0x12000, scoped, tag = 'internal scratch']
  #allocation2 [shape = 'f32[4,1,1]{2,1,0:T(1,128)}', space=vmem, size = 0x800, scoped, tag = 'scratch operand']
  #allocation3 [shape = 'f32[4,1,1]{2,1,0:T(1,128)}', space=vmem, size = 0x800, scoped, tag = 'scratch operand']
  #allocation4 [shape = 'f32[1,16]{1,0:T(1,128)}', space=vmem, size = 0x200, scoped, tag = 'scratch operand']
  #allocation5 [shape = 'f32[1,16]{1,0:T(1,128)}', space=vmem, size = 0x200, scoped, tag = 'scratch operand']
  %s0 = inlined_call_operand.vmem [shape: f32[2,4,16,16], index: 0, kind: input, shape index: {}]
  %s1 = inlined_call_operand.vmem [shape: f32[2,4,1,2], index: 1, kind: output, shape index: {0}]
  %s2 = inlined_call_operand.vmem [shape: f32[2,16,2], index: 2, kind: output, shape index: {1}]
  %s3 = inlined_call_operand.vmem [shape: f32[2,2,16], index: 3, kind: output, shape index: {2}]
  %4 = xla_tuple %s1, %s2, %s3
  %s5 = sld [smem:[#allocation0]]
  $region61: #{mca_layer.1} parent=0
    _
  %s7 = ssub.s32 1, %s5
  %s8 = scalar_select 0, %s7, %s5
  loop: start=0, step=1, limit=4
  $region2: #{mca_layer.1} parent=0 // loop_pre_header
    _
  $region3: #{mca_layer.1} parent=0 // loop_header
    %s10 = sphi 0, %s14
    %p11 = scmp.ge.s32.totalorder %s10, 4
    %s17 = sphi 0, %s29
    %s18 = sphi 0, %s25
    %s19 = sphi 0, %s17
    %s20 = sphi 0, %s18
    %s21 = sphi 0, %s19
    %s22 = sphi 0, %s20
    %s34 = sphi 0, %s36
    %s37 = sphi 0, %s34
    %s38 = sphi 0, %s37
    %s54 = sphi 0, %s38
    %s60 = sphi 0, %s62
    %s63 = sphi 0, %s60
    %s64 = sphi 0, %s63
    %s80 = sphi 0, %s64
    %s88 = sphi 0, %s90
    %s91 = sphi 0, %s88
    %s92 = sphi 0, %s91
    %s108 = sphi 0, %s92
    %s114 = sphi 0, %s116
    %s117 = sphi 0, %s114
    %s118 = sphi 0, %s117
    %s134 = sphi 0, %s118
  $region4: #{mca_layer.1} parent=0 // loop_header_branch
    %13 = sbr.rel (%p11) target = $region8
  $region5: #{mca_layer.1} parent=0 // loop_body
    %s15 = ssub.s32 %s10, 1
    %s16 = ssub.s32 %s10, 2
    %s23 = sadd.s32 1, %s18
    %p24 = scmp.ge.s32.totalorder %s23, 1
    %s25 = scalar_select %p24, 0, %s23
    %s26 = sadd.s32 1, %s17
    %s27 = scalar_select %p24, %s26, %s17
    %p28 = scmp.ge.s32.totalorder %s27, 2
    %s29 = scalar_select %p28, 0, %s27
    %s30 = ssub.s32 %s17, %s29
    %s31 = ssub.s32 %s18, %s25
    %s32 = sor.u32 %s30, %s31
    %p33 = scmp.eq.s32.totalorder %s32, 0
    %s35 = sadd.s32 %s34, 1
    %s36 = scalar_select %p33, %s34, %s35
    %p39 = pneg %p33
    %p40 = scmp.eq.s32.totalorder %s10, 1
    %p41 = por %p39, %p40
    %p42 = scmp.ne.s32.totalorder %s34, %s37
    %p43 = scmp.eq.s32.totalorder %s10, 0
    %p44 = por %p42, %p43
    %p45 = scmp.ne.s32.totalorder %s34, %s37
    %p46 = scmp.eq.s32.totalorder %s15, 1
    %p47 = por %p45, %p46
    %p48 = scmp.ne.s32.totalorder %s37, %s38
    %p49 = scmp.eq.s32.totalorder %s15, 0
    %p50 = por %p48, %p49
    %p51 = scmp.ne.s32.totalorder %s37, %s38
    %p52 = scmp.eq.s32.totalorder %s16, 1
    %p53 = por %p51, %p52
    %p55 = scmp.ne.s32.totalorder %s38, %s54
    %p56 = scmp.eq.s32.totalorder %s16, 0
    %p57 = por %p55, %p56
    %s58 = ssub.s32 %s17, %s29
    %p59 = scmp.eq.s32.totalorder %s58, 0
    %s61 = sadd.s32 %s60, 1
    %s62 = scalar_select %p59, %s60, %s61
    %p65 = pneg %p59
    %p66 = scmp.eq.s32.totalorder %s10, 1
    %p67 = por %p65, %p66
    %p68 = scmp.ne.s32.totalorder %s60, %s63
    %p69 = scmp.eq.s32.totalorder %s10, 0
    %p70 = por %p68, %p69
    %p71 = scmp.ne.s32.totalorder %s60, %s63
    %p72 = scmp.eq.s32.totalorder %s15, 1
    %p73 = por %p71, %p72
    %p74 = scmp.ne.s32.totalorder %s63, %s64
    %p75 = scmp.eq.s32.totalorder %s15, 0
    %p76 = por %p74, %p75
    %p77 = scmp.ne.s32.totalorder %s63, %s64
    %p78 = scmp.eq.s32.totalorder %s16, 1
    %p79 = por %p77, %p78
    %p81 = scmp.ne.s32.totalorder %s64, %s80
    %p82 = scmp.eq.s32.totalorder %s16, 0
    %p83 = por %p81, %p82
    %s84 = ssub.s32 %s17, %s29
    %s85 = ssub.s32 %s18, %s25
    %s86 = sor.u32 %s84, %s85
    %p87 = scmp.eq.s32.totalorder %s86, 0
    %s89 = sadd.s32 %s88, 1
    %s90 = scalar_select %p87, %s88, %s89
    %p93 = pneg %p87
    %p94 = scmp.eq.s32.totalorder %s10, 1
    %p95 = por %p93, %p94
    %p96 = scmp.ne.s32.totalorder %s88, %s91
    %p97 = scmp.eq.s32.totalorder %s10, 0
    %p98 = por %p96, %p97
    %p99 = scmp.ne.s32.totalorder %s88, %s91
    %p100 = scmp.eq.s32.totalorder %s15, 1
    %p101 = por %p99, %p100
    %p102 = scmp.ne.s32.totalorder %s91, %s92
    %p103 = scmp.eq.s32.totalorder %s15, 0
    %p104 = por %p102, %p103
    %p105 = scmp.ne.s32.totalorder %s91, %s92
    %p106 = scmp.eq.s32.totalorder %s16, 1
    %p107 = por %p105, %p106
    %p109 = scmp.ne.s32.totalorder %s92, %s108
    %p110 = scmp.eq.s32.totalorder %s16, 0
    %p111 = por %p109, %p110
    %s112 = ssub.s32 %s17, %s29
    %p113 = scmp.eq.s32.totalorder %s112, 0
    %s115 = sadd.s32 %s114, 1
    %s116 = scalar_select %p113, %s114, %s115
    %p119 = pneg %p113
    %p120 = scmp.eq.s32.totalorder %s10, 1
    %p121 = por %p119, %p120
    %p122 = scmp.ne.s32.totalorder %s114, %s117
    %p123 = scmp.eq.s32.totalorder %s10, 0
    %p124 = por %p122, %p123
    %p125 = scmp.ne.s32.totalorder %s114, %s117
    %p126 = scmp.eq.s32.totalorder %s15, 1
    %p127 = por %p125, %p126
    %p128 = scmp.ne.s32.totalorder %s117, %s118
    %p129 = scmp.eq.s32.totalorder %s15, 0
    %p130 = por %p128, %p129
    %p131 = scmp.ne.s32.totalorder %s117, %s118
    %p132 = scmp.eq.s32.totalorder %s16, 1
    %p133 = por %p131, %p132
    %p135 = scmp.ne.s32.totalorder %s118, %s134
    %p136 = scmp.eq.s32.totalorder %s16, 0
    %p137 = por %p135, %p136
    %p138 = scmp.le.s32.totalorder 1, %s10
    %p139 = scmp.lt.s32.totalorder %s10, 3
    %p140 = pnand %p138, %p139
    %p141 = pneg %p140
    // Predicated region
    $region9: #{mca_layer.1} parent=5 // pred_check
      _
    $region10: #{mca_layer.1} parent=5 // pred_check_branch
      %143 = sbr.rel (%p140) target = $region12
    $region11: #{mca_layer.1} parent=5 // pred_region
      %s144 = ssub.s32 %s10, 1
    $region12: #{mca_layer.1} parent=5 // pred_fallthru
      _
    %p145 = scmp.lt.s32.totalorder %s10, 2
    // Predicated region
    $region13: #{mca_layer.1} parent=5 // pred_check
      %p146 = pneg %p145
    $region14: #{mca_layer.1} parent=5 // pred_check_branch
      %148 = sbr.rel (%p146) target = $region16
    $region15: #{mca_layer.1} parent=5 // pred_region
      // Predicated region
      $region17: #{mca_layer.1} parent=15 // pred_check
        %p149 = pneg %p44
      $region18: #{mca_layer.1} parent=15 // pred_check_branch
        %151 = sbr.rel (%p149) target = $region20
      $region19: #{mca_layer.1} parent=15 // pred_region
        %s152 = smul.u32 2, %s18
        %p153 = scmp.lt.s32.totalorder %s17, 1
        %s154 = scalar_select %p153, %s17, 1
        %p155 = scmp.lt.s32.totalorder %s152, 1
        %s156 = scalar_select %p155, %s152, 1
        %s157 = smul.addr %s154, 8
        %s158 = sadd.s32 %s156, %s157
        %s159 = smul.addr %s158, 8
        %s160 = scalar_lea.vmem %s0, %s159
        %s161 = smul.u32 2, %s18
      $region20: #{mca_layer.1} parent=15 // pred_fallthru
        _
    $region16: #{mca_layer.1} parent=5 // pred_fallthru
      _
    %p162 = scmp.le.s32.totalorder 1, %s10
    %p163 = scmp.lt.s32.totalorder %s10, 3
    %p164 = pnand %p162, %p163
    %p165 = pneg %p164
    // Predicated region
    $region21: #{mca_layer.1} parent=5 // pred_check
      _
    $region22: #{mca_layer.1} parent=5 // pred_check_branch
      %167 = sbr.rel (%p164) target = $region24
    $region23: #{mca_layer.1} parent=5 // pred_region
      %s168 = ssub.s32 %s10, 1
      %s169 = smul.u32 2, %s20
      %p170 = scmp.lt.s32.totalorder %s19, 1
      %s171 = scalar_select %p170, %s19, 1
      %p172 = scmp.lt.s32.totalorder %s169, 1
      %s173 = scalar_select %p172, %s169, 1
      %s174 = smul.addr %s171, 8
      %s175 = sadd.s32 %s173, %s174
      %s176 = smul.addr %s175, 8
      %s177 = scalar_lea.vmem %s0, %s176
      %p178 = pneg %p50
      %p179 = pneg %p47
      %p180 = pneg %p76
      %p181 = pneg %p73
      %p182 = scmp.lt.s32.totalorder %s19, 1
      %s183 = scalar_select %p182, %s19, 1
      %s184 = smul.addr %s183, 4
      %s185 = scalar_lea.vmem %s1, %s184
      %p186 = pneg %p104
      %p187 = pneg %p101
      %s188 = smul.u32 2, %s20
      %p189 = scmp.lt.s32.totalorder %s19, 1
      %s190 = scalar_select %p189, %s19, 1
      %p191 = scmp.lt.s32.totalorder %s188, 1
      %s192 = scalar_select %p191, %s188, 1
      %s193 = smul.addr %s190, 2
      %s194 = sadd.s32 %s192, %s193
      %s195 = smul.addr %s194, 8
      %s196 = scalar_lea.vmem %s2, %s195
      %p197 = pneg %p130
      %p198 = pneg %p127
      %p199 = scmp.lt.s32.totalorder %s19, 1
      %s200 = scalar_select %p199, %s19, 1
      %s201 = smul.addr %s200, 2
      %s202 = scalar_lea.vmem %s3, %s201
      %s203 = smul.u32 2, %s20
      %p204 = scmp.lt.s32.totalorder %s19, 1
      %s205 = scalar_select %p204, %s19, 1
      %p206 = scmp.lt.s32.totalorder %s203, 1
      %s207 = scalar_select %p206, %s203, 1
      %s208 = smul.addr %s205, 8
      %s209 = sadd.s32 %s207, %s208
      %s210 = smul.addr %s209, 8
      %s211 = scalar_lea.vmem %s0, %s210
      %s212 = smul.u32 2, %s20
      %p213 = scmp.lt.s32.totalorder %s19, 1
      %s214 = scalar_select %p213, %s19, 1
      %s215 = smul.addr %s214, 4
      %s216 = scalar_lea.vmem %s1, %s215
      %s217 = smul.u32 2, %s20
      %p218 = scmp.lt.s32.totalorder %s19, 1
      %s219 = scalar_select %p218, %s19, 1
      %p220 = scmp.lt.s32.totalorder %s217, 1
      %s221 = scalar_select %p220, %s217, 1
      %s222 = smul.addr %s219, 2
      %s223 = sadd.s32 %s221, %s222
      %s224 = smul.addr %s223, 8
      %s225 = scalar_lea.vmem %s2, %s224
      %s226 = smul.u32 2, %s20
      %p227 = scmp.lt.s32.totalorder %s19, 1
      %s228 = scalar_select %p227, %s19, 1
      %s229 = smul.addr %s228, 2
      %s230 = scalar_lea.vmem %s3, %s229
      %p231 = scmp.eq.s32.totalorder %s20, 0
      // Predicated region
      $region25: #{mca_layer.1} parent=23 // pred_check
        %p232 = pneg %p231
      $region26: #{mca_layer.1} parent=23 // pred_check_branch
        %234 = sbr.rel (%p232) target = $region28
      $region27: #{mca_layer.1} parent=23 // pred_region
        %vm235 = vcmask 0
        %236 = vst.msk [vmem:[#allocation2] sm:$0x1] %vm235, 0.0
        %237 = vst.msk [vmem:[#allocation2 + $0x1] sm:$0x1] %vm235, 0.0
        %238 = vst.msk [vmem:[#allocation2 + $0x2] sm:$0x1] %vm235, 0.0
        %239 = vst.msk [vmem:[#allocation2 + $0x3] sm:$0x1] %vm235, 0.0
        %240 = vst.msk [vmem:[#allocation3] sm:$0x1] %vm235, 0.0
        %241 = vst.msk [vmem:[#allocation3 + $0x1] sm:$0x1] %vm235, 0.0
        %242 = vst.msk [vmem:[#allocation3 + $0x2] sm:$0x1] %vm235, 0.0
        %243 = vst.msk [vmem:[#allocation3 + $0x3] sm:$0x1] %vm235, 0.0
        %vm244 = vcmask 122880
        %245 = vst.msk [vmem:[#allocation4] sm:$0x1] %vm244, 0.0
        %246 = vst.msk [vmem:[#allocation5] sm:$0x1] %vm244, 0.0
      $region28: #{mca_layer.1} parent=23 // pred_fallthru
        _
      %v247 = vld [vmem:[%s211] sm:$0xff]
      %v248 = vld [vmem:[%s211 + $0x8] sm:$0xff]
      %v249 = vld [vmem:[%s211 + $0x10] sm:$0xff]
      %v250 = vld [vmem:[%s211 + $0x18] sm:$0xff]
      %v251 = vld [vmem:[%s211 + $0x20] sm:$0xff]
      %v252 = vld [vmem:[%s211 + $0x28] sm:$0xff]
      %v253 = vld [vmem:[%s211 + $0x30] sm:$0xff]
      %v254 = vld [vmem:[%s211 + $0x38] sm:$0xff]
      %v255 = vmul.f32 %v247, %v247
      %v256 = vmul.f32 %v248, %v248
      %v257 = vmul.f32 %v249, %v249
      %v258 = vmul.f32 %v250, %v250
      %v259 = vmul.f32 %v251, %v251
      %v260 = vmul.f32 %v252, %v252
      %v261 = vmul.f32 %v253, %v253
      %v262 = vmul.f32 %v254, %v254
      %vm263 = vcmask 130048
      %v264 = vsel %vm263, %v247, 0.0
      %v265 = vsel %vm263, %v249, 0.0
      %v266 = vadd.f32 %v264, %v265
      %v267 = vsel %vm263, %v251, 0.0
      %v268 = vadd.f32 %v266, %v267
      %v269 = vsel %vm263, %v253, 0.0
      %v270 = vadd.f32 %v268, %v269
      %v271 = vsel %vm263, %v248, 0.0
      %v272 = vsel %vm263, %v250, 0.0
      %v273 = vadd.f32 %v271, %v272
      %v274 = vsel %vm263, %v252, 0.0
      %v275 = vadd.f32 %v273, %v274
      %v276 = vsel %vm263, %v254, 0.0
      %v277 = vadd.f32 %v275, %v276
      %v278 = vsel %vm263, %v255, 0.0
      %v279 = vsel %vm263, %v257, 0.0
      %v280 = vadd.f32 %v278, %v279
      %v281 = vsel %vm263, %v259, 0.0
      %v282 = vadd.f32 %v280, %v281
      %v283 = vsel %vm263, %v261, 0.0
      %v284 = vadd.f32 %v282, %v283
      %v285 = vsel %vm263, %v256, 0.0
      %v286 = vsel %vm263, %v258, 0.0
      %v287 = vadd.f32 %v285, %v286
      %v288 = vsel %vm263, %v260, 0.0
      %v289 = vadd.f32 %v287, %v288
      %v290 = vsel %vm263, %v262, 0.0
      %v291 = vadd.f32 %v289, %v290
      %v292 = vsel %vm263, %v270, 0.0
      %293 = vadd.xlane.f32.xlu0 %v292
      %v294 = vpop.xlane.xlu0 %293
      %v295 = vsel %vm263, %v277, 0.0
      %296 = vadd.xlane.f32.xlu0 %v295
      %v297 = vpop.xlane.xlu0 %296
      %v298 = vsel %vm263, %v284, 0.0
      %299 = vadd.xlane.f32.xlu0 %v298
      %v300 = vpop.xlane.xlu0 %299
      %v301 = vsel %vm263, %v291, 0.0
      %302 = vadd.xlane.f32.xlu0 %v301
      %v303 = vpop.xlane.xlu0 %302
      %v304 = vmul.f32 %v294, 0.015625
      %v305 = vmul.f32 %v297, 0.015625
      %v306 = vmul.f32 %v294, %v304
      %v307 = vmul.f32 %v297, %v305
      %v308 = vsub.f32 %v300, %v306
      %v309 = vsub.f32 %v303, %v307
      %v310 = vmul.f32 %v308, 0.015873017
      %v311 = vmul.f32 %v309, 0.015873017
      %v312 = vmax.f32 %v310, 0.0
      %v313 = vmax.f32 %v311, 0.0
      %vm314 = vcmask 7168
      %315 = vst.msk [vmem:[%s225] sm:$0xff] %vm314, %v304
      %316 = vst.msk [vmem:[%s225 + $0x8] sm:$0xff] %vm314, %v305
      %v317 = vrsqrt.pop %v312
      %v318 = vmul.f32 %v312, %v317
      %vm319 = vcmp.eq.f32.partialorder %v312, inf
      %v320 = vsel %vm319, %v312, %v318
      %vm321 = vcmp.eq.f32.partialorder %v312, 0.0
      %v322 = vand.u32 %v312, 2147483648
      %v323 = vsel %vm321, %v322, %v320
      %v324 = vrsqrt.pop %v313
      %v325 = vmul.f32 %v313, %v324
      %vm326 = vcmp.eq.f32.partialorder %v313, inf
      %v327 = vsel %vm326, %v313, %v325
      %vm328 = vcmp.eq.f32.partialorder %v313, 0.0
      %v329 = vand.u32 %v313, 2147483648
      %v330 = vsel %vm328, %v329, %v327
      %vm331 = vcmask 15368
      %332 = vst.msk [vmem:[%s225] sm:$0xff] %vm331, %v323
      %333 = vst.msk [vmem:[%s225 + $0x8] sm:$0xff] %vm331, %v330
      %v334 = vld [vmem:[#allocation4] sm:$0x1]
      %v335 = vadd.f32 %v292, %v295
      %v336 = vrot.slane %v335, 4
      %v337 = vadd.f32 %v335, %v336
      %v338 = vrot.slane %v337, 2
      %v339 = vadd.f32 %v337, %v338
      %v340 = vrot.slane %v339, 1
      %v341 = vadd.f32 %v339, %v340
      %v342 = vadd.f32 %v334, %v341
      %vm343 = vcmask 122880
      %344 = vst.msk [vmem:[#allocation4] sm:$0x1] %vm343, %v342
      %v345 = vld [vmem:[#allocation5] sm:$0x1]
      %v346 = vadd.f32 %v298, %v301
      %v347 = vrot.slane %v346, 4
      %v348 = vadd.f32 %v346, %v347
      %v349 = vrot.slane %v348, 2
      %v350 = vadd.f32 %v348, %v349
      %v351 = vrot.slane %v350, 1
      %v352 = vadd.f32 %v350, %v351
      %v353 = vadd.f32 %v345, %v352
      %354 = vst.msk [vmem:[#allocation5] sm:$0x1] %vm343, %v353
      %355 = vadd.xlane.f32.xlu0 %v264
      %v356 = vpop.xlane.xlu0 %355
      %357 = vadd.xlane.f32.xlu0 %v271
      %v358 = vpop.xlane.xlu0 %357
      %359 = vadd.xlane.f32.xlu0 %v265
      %v360 = vpop.xlane.xlu0 %359
      %361 = vadd.xlane.f32.xlu0 %v272
      %v362 = vpop.xlane.xlu0 %361
      %363 = vadd.xlane.f32.xlu0 %v267
      %v364 = vpop.xlane.xlu0 %363
      %365 = vadd.xlane.f32.xlu0 %v274
      %v366 = vpop.xlane.xlu0 %365
      %367 = vadd.xlane.f32.xlu0 %v269
      %v368 = vpop.xlane.xlu0 %367
      %369 = vadd.xlane.f32.xlu0 %v276
      %v370 = vpop.xlane.xlu0 %369
      %371 = vadd.xlane.f32.xlu0 %v278
      %v372 = vpop.xlane.xlu0 %371
      %373 = vadd.xlane.f32.xlu0 %v285
      %v374 = vpop.xlane.xlu0 %373
      %375 = vadd.xlane.f32.xlu0 %v279
      %v376 = vpop.xlane.xlu0 %375
      %377 = vadd.xlane.f32.xlu0 %v286
      %v378 = vpop.xlane.xlu0 %377
      %379 = vadd.xlane.f32.xlu0 %v281
      %v380 = vpop.xlane.xlu0 %379
      %381 = vadd.xlane.f32.xlu0 %v288
      %v382 = vpop.xlane.xlu0 %381
      %383 = vadd.xlane.f32.xlu0 %v283
      %v384 = vpop.xlane.xlu0 %383
      %385 = vadd.xlane.f32.xlu0 %v290
      %v386 = vpop.xlane.xlu0 %385
      %v387 = vld [vmem:[#allocation2] sm:$0x1]
      %v388 = vld [vmem:[#allocation2 + $0x1] sm:$0x1]
      %v389 = vld [vmem:[#allocation2 + $0x2] sm:$0x1]
      %v390 = vld [vmem:[#allocation2 + $0x3] sm:$0x1]
      %v391 = vadd.f32 %v356, %v358
      %v392 = vrot.slane %v391, 4
      %v393 = vadd.f32 %v391, %v392
      %v394 = vrot.slane %v393, 2
      %v395 = vadd.f32 %v393, %v394
      %v396 = vrot.slane %v395, 1
      %v397 = vadd.f32 %v395, %v396
      %v398 = vadd.f32 %v360, %v362
      %v399 = vrot.slane %v398, 4
      %v400 = vadd.f32 %v398, %v399
      %v401 = vrot.slane %v400, 2
      %v402 = vadd.f32 %v400, %v401
      %v403 = vrot.slane %v402, 1
      %v404 = vadd.f32 %v402, %v403
      %v405 = vadd.f32 %v364, %v366
      %v406 = vrot.slane %v405, 4
      %v407 = vadd.f32 %v405, %v406
      %v408 = vrot.slane %v407, 2
      %v409 = vadd.f32 %v407, %v408
      %v410 = vrot.slane %v409, 1
      %v411 = vadd.f32 %v409, %v410
      %v412 = vadd.f32 %v368, %v370
      %v413 = vrot.slane %v412, 4
      %v414 = vadd.f32 %v412, %v413
      %v415 = vrot.slane %v414, 2
      %v416 = vadd.f32 %v414, %v415
      %v417 = vrot.slane %v416, 1
      %v418 = vadd.f32 %v416, %v417
      %v419 = vadd.f32 %v387, %v397
      %v420 = vadd.f32 %v388, %v404
      %v421 = vadd.f32 %v389, %v411
      %v422 = vadd.f32 %v390, %v418
      %vm423 = vcmask 0
      %424 = vst.msk [vmem:[#allocation2] sm:$0x1] %vm423, %v419
      %425 = vst.msk [vmem:[#allocation2 + $0x1] sm:$0x1] %vm423, %v420
      %426 = vst.msk [vmem:[#allocation2 + $0x2] sm:$0x1] %vm423, %v421
      %427 = vst.msk [vmem:[#allocation2 + $0x3] sm:$0x1] %vm423, %v422
      %v428 = vld [vmem:[#allocation3] sm:$0x1]
      %v429 = vld [vmem:[#allocation3 + $0x1] sm:$0x1]
      %v430 = vld [vmem:[#allocation3 + $0x2] sm:$0x1]
      %v431 = vld [vmem:[#allocation3 + $0x3] sm:$0x1]
      %v432 = vadd.f32 %v372, %v374
      %v433 = vrot.slane %v432, 4
      %v434 = vadd.f32 %v432, %v433
      %v435 = vrot.slane %v434, 2
      %v436 = vadd.f32 %v434, %v435
      %v437 = vrot.slane %v436, 1
      %v438 = vadd.f32 %v436, %v437
      %v439 = vadd.f32 %v376, %v378
      %v440 = vrot.slane %v439, 4
      %v441 = vadd.f32 %v439, %v440
      %v442 = vrot.slane %v441, 2
      %v443 = vadd.f32 %v441, %v442
      %v444 = vrot.slane %v443, 1
      %v445 = vadd.f32 %v443, %v444
      %v446 = vadd.f32 %v380, %v382
      %v447 = vrot.slane %v446, 4
      %v448 = vadd.f32 %v446, %v447
      %v449 = vrot.slane %v448, 2
      %v450 = vadd.f32 %v448, %v449
      %v451 = vrot.slane %v450, 1
      %v452 = vadd.f32 %v450, %v451
      %v453 = vadd.f32 %v384, %v386
      %v454 = vrot.slane %v453, 4
      %v455 = vadd.f32 %v453, %v454
      %v456 = vrot.slane %v455, 2
      %v457 = vadd.f32 %v455, %v456
      %v458 = vrot.slane %v457, 1
      %v459 = vadd.f32 %v457, %v458
      %v460 = vadd.f32 %v428, %v438
      %v461 = vadd.f32 %v429, %v445
      %v462 = vadd.f32 %v430, %v452
      %v463 = vadd.f32 %v431, %v459
      %464 = vst.msk [vmem:[#allocation3] sm:$0x1] %vm423, %v460
      %465 = vst.msk [vmem:[#allocation3 + $0x1] sm:$0x1] %vm423, %v461
      %466 = vst.msk [vmem:[#allocation3 + $0x2] sm:$0x1] %vm423, %v462
      %467 = vst.msk [vmem:[#allocation3 + $0x3] sm:$0x1] %vm423, %v463
      // Predicated region
      $region29: #{mca_layer.1} parent=23 // pred_check
        %p468 = pneg %p231
      $region30: #{mca_layer.1} parent=23 // pred_check_branch
        %470 = sbr.rel (%p468) target = $region32
      $region31: #{mca_layer.1} parent=23 // pred_region
        %v471 = vld [vmem:[#allocation2] sm:$0x1]
        %v472 = vld [vmem:[#allocation2 + $0x1] sm:$0x1]
        %v473 = vld [vmem:[#allocation2 + $0x2] sm:$0x1]
        %v474 = vld [vmem:[#allocation2 + $0x3] sm:$0x1]
        %v475 = vmul.f32 %v471, 0.00390625
        %v476 = vmul.f32 %v472, 0.00390625
        %v477 = vmul.f32 %v473, 0.00390625
        %v478 = vmul.f32 %v474, 0.00390625
        %v479 = vld [vmem:[#allocation3] sm:$0x1]
        %v480 = vld [vmem:[#allocation3 + $0x1] sm:$0x1]
        %v481 = vld [vmem:[#allocation3 + $0x2] sm:$0x1]
        %v482 = vld [vmem:[#allocation3 + $0x3] sm:$0x1]
        %v483 = vmul.f32 %v471, %v475
        %v484 = vmul.f32 %v472, %v476
        %v485 = vmul.f32 %v473, %v477
        %v486 = vmul.f32 %v474, %v478
        %v487 = vsub.f32 %v479, %v483
        %v488 = vsub.f32 %v480, %v484
        %v489 = vsub.f32 %v481, %v485
        %v490 = vsub.f32 %v482, %v486
        %v491 = vmul.f32 %v487, 0.003921569
        %v492 = vmul.f32 %v488, 0.003921569
        %v493 = vmul.f32 %v489, 0.003921569
        %v494 = vmul.f32 %v490, 0.003921569
        %v495 = vmax.f32 %v491, 0.0
        %v496 = vmax.f32 %v492, 0.0
        %v497 = vmax.f32 %v493, 0.0
        %v498 = vmax.f32 %v494, 0.0
        %499 = vst.msk [vmem:[%s216] sm:$0x1] %vm423, %v475
        %500 = vst.msk [vmem:[%s216 + $0x1] sm:$0x1] %vm423, %v476
        %501 = vst.msk [vmem:[%s216 + $0x2] sm:$0x1] %vm423, %v477
        %502 = vst.msk [vmem:[%s216 + $0x3] sm:$0x1] %vm423, %v478
        %v503 = vrsqrt.pop %v495
        %v504 = vmul.f32 %v495, %v503
        %vm505 = vcmp.eq.f32.partialorder %v495, inf
        %v506 = vsel %vm505, %v495, %v504
        %vm507 = vcmp.eq.f32.partialorder %v495, 0.0
        %v508 = vand.u32 %v495, 2147483648
        %v509 = vsel %vm507, %v508, %v506
        %v510 = vrsqrt.pop %v496
        %v511 = vmul.f32 %v496, %v510
        %vm512 = vcmp.eq.f32.partialorder %v496, inf
        %v513 = vsel %vm512, %v496, %v511
        %vm514 = vcmp.eq.f32.partialorder %v496, 0.0
        %v515 = vand.u32 %v496, 2147483648
        %v516 = vsel %vm514, %v515, %v513
        %v517 = vrsqrt.pop %v497
        %v518 = vmul.f32 %v497, %v517
        %vm519 = vcmp.eq.f32.partialorder %v497, inf
        %v520 = vsel %vm519, %v497, %v518
        %vm521 = vcmp.eq.f32.partialorder %v497, 0.0
        %v522 = vand.u32 %v497, 2147483648
        %v523 = vsel %vm521, %v522, %v520
        %v524 = vrsqrt.pop %v498
        %v525 = vmul.f32 %v498, %v524
        %vm526 = vcmp.eq.f32.partialorder %v498, inf
        %v527 = vsel %vm526, %v498, %v525
        %vm528 = vcmp.eq.f32.partialorder %v498, 0.0
        %v529 = vand.u32 %v498, 2147483648
        %v530 = vsel %vm528, %v529, %v527
        %v535 = vlaneseq
        %v536 = vshrl.u32 %v535, 7
        %v537 = vsub.s32 0, %v536
        %v538 = vrot.slane %v509, %v537
        %v539 = vlaneseq
        %v540 = vshrl.u32 %v539, 7
        %v541 = vsub.s32 0, %v540
        %v542 = vrot.slane %v516, %v541
        %v543 = vlaneseq
        %v544 = vshrl.u32 %v543, 7
        %v545 = vsub.s32 0, %v544
        %v546 = vrot.slane %v523, %v545
        %v547 = vlaneseq
        %v548 = vshrl.u32 %v547, 7
        %v549 = vsub.s32 0, %v548
        %v550 = vrot.slane %v530, %v549
        %551 = vrot.lane.b32.xlu0 %v538, 1
        %v552 = vpop.permute.xlu0 %551
        %553 = vrot.lane.b32.xlu0 %v542, 1
        %v554 = vpop.permute.xlu0 %553
        %555 = vrot.lane.b32.xlu0 %v546, 1
        %v556 = vpop.permute.xlu0 %555
        %557 = vrot.lane.b32.xlu0 %v550, 1
        %v558 = vpop.permute.xlu0 %557
        %vm563 = vcmask 8200
        %564 = vst.msk [vmem:[%s216] sm:$0x1] %vm563, %v552
        %565 = vst.msk [vmem:[%s216 + $0x1] sm:$0x1] %vm563, %v554
        %566 = vst.msk [vmem:[%s216 + $0x2] sm:$0x1] %vm563, %v556
        %567 = vst.msk [vmem:[%s216 + $0x3] sm:$0x1] %vm563, %v558
        %v568 = vld [vmem:[#allocation4] sm:$0x1]
        %v569 = vmul.f32 %v568, 0.015625
        %v570 = vld [vmem:[#allocation5] sm:$0x1]
        %v571 = vmul.f32 %v568, %v569
        %v572 = vsub.f32 %v570, %v571
        %v573 = vmul.f32 %v572, 0.015873017
        %v574 = vmax.f32 %v573, 0.0
        %575 = vst.msk [vmem:[%s230] sm:$0x1] %vm343, %v569
        %v576 = vrsqrt.pop %v574
        %v577 = vmul.f32 %v574, %v576
        %vm578 = vcmp.eq.f32.partialorder %v574, inf
        %v579 = vsel %vm578, %v574, %v577
        %vm580 = vcmp.eq.f32.partialorder %v574, 0.0
        %v581 = vand.u32 %v574, 2147483648
        %v582 = vsel %vm580, %v581, %v579
        %583 = vst.msk [vmem:[%s230 + $0x1] sm:$0x1] %vm343, %v582
      $region32: #{mca_layer.1} parent=23 // pred_fallthru
        _
      %p584 = scmp.lt.s32.totalorder %s19, 1
      %s585 = scalar_select %p584, %s19, 1
      %s586 = smul.addr %s585, 4
      %s587 = scalar_lea.vmem %s1, %s586
      %s588 = smul.u32 2, %s20
      %p589 = scmp.lt.s32.totalorder %s19, 1
      %s590 = scalar_select %p589, %s19, 1
      %p591 = scmp.lt.s32.totalorder %s588, 1
      %s592 = scalar_select %p591, %s588, 1
      %s593 = smul.addr %s590, 2
      %s594 = sadd.s32 %s592, %s593
      %s595 = smul.addr %s594, 8
      %s596 = scalar_lea.vmem %s2, %s595
      %p597 = scmp.lt.s32.totalorder %s19, 1
      %s598 = scalar_select %p597, %s19, 1
      %s599 = smul.addr %s598, 2
      %s600 = scalar_lea.vmem %s3, %s599
      // Predicated region
      $region33: #{mca_layer.1} parent=23 // pred_check
        %p601 = pneg %p73
      $region34: #{mca_layer.1} parent=23 // pred_check_branch
        %603 = sbr.rel (%p601) target = $region36
      $region35: #{mca_layer.1} parent=23 // pred_region
        _
      $region36: #{mca_layer.1} parent=23 // pred_fallthru
        _
      // Predicated region
      $region37: #{mca_layer.1} parent=23 // pred_check
        %p604 = pneg %p101
      $region38: #{mca_layer.1} parent=23 // pred_check_branch
        %606 = sbr.rel (%p604) target = $region40
      $region39: #{mca_layer.1} parent=23 // pred_region
        %s607 = smul.u32 2, %s20
      $region40: #{mca_layer.1} parent=23 // pred_fallthru
        _
      // Predicated region
      $region41: #{mca_layer.1} parent=23 // pred_check
        %p608 = pneg %p127
      $region42: #{mca_layer.1} parent=23 // pred_check_branch
        %610 = sbr.rel (%p608) target = $region44
      $region43: #{mca_layer.1} parent=23 // pred_region
        _
      $region44: #{mca_layer.1} parent=23 // pred_fallthru
        _
    $region24: #{mca_layer.1} parent=5 // pred_fallthru
      _
    %p611 = scmp.le.s32.totalorder 2, %s10
    // Predicated region
    $region45: #{mca_layer.1} parent=5 // pred_check
      %p612 = pneg %p611
    $region46: #{mca_layer.1} parent=5 // pred_check_branch
      %614 = sbr.rel (%p612) target = $region48
    $region47: #{mca_layer.1} parent=5 // pred_region
      %s615 = ssub.s32 %s10, 2
      // Predicated region
      $region49: #{mca_layer.1} parent=47 // pred_check
        %p616 = pneg %p79
      $region50: #{mca_layer.1} parent=47 // pred_check_branch
        %618 = sbr.rel (%p616) target = $region52
      $region51: #{mca_layer.1} parent=47 // pred_region
        %p619 = scmp.lt.s32.totalorder %s21, 1
        %s620 = scalar_select %p619, %s21, 1
        %s621 = smul.addr %s620, 4
        %s622 = scalar_lea.vmem %s1, %s621
      $region52: #{mca_layer.1} parent=47 // pred_fallthru
        _
      // Predicated region
      $region53: #{mca_layer.1} parent=47 // pred_check
        %p623 = pneg %p107
      $region54: #{mca_layer.1} parent=47 // pred_check_branch
        %625 = sbr.rel (%p623) target = $region56
      $region55: #{mca_layer.1} parent=47 // pred_region
        %s626 = smul.u32 2, %s22
        %p627 = scmp.lt.s32.totalorder %s21, 1
        %s628 = scalar_select %p627, %s21, 1
        %p629 = scmp.lt.s32.totalorder %s626, 1
        %s630 = scalar_select %p629, %s626, 1
        %s631 = smul.addr %s628, 2
        %s632 = sadd.s32 %s630, %s631
        %s633 = smul.addr %s632, 8
        %s634 = scalar_lea.vmem %s2, %s633
      $region56: #{mca_layer.1} parent=47 // pred_fallthru
        _
      // Predicated region
      $region57: #{mca_layer.1} parent=47 // pred_check
        %p635 = pneg %p133
      $region58: #{mca_layer.1} parent=47 // pred_check_branch
        %637 = sbr.rel (%p635) target = $region60
      $region59: #{mca_layer.1} parent=47 // pred_region
        %p638 = scmp.lt.s32.totalorder %s21, 1
        %s639 = scalar_select %p638, %s21, 1
        %s640 = smul.addr %s639, 2
        %s641 = scalar_lea.vmem %s3, %s640
      $region60: #{mca_layer.1} parent=47 // pred_fallthru
        _
    $region48: #{mca_layer.1} parent=5 // pred_fallthru
      _
  $region6: #{mca_layer.1} parent=0 // loop_footer
    %s14 = sadd.s32 1, %s10
  $region7: #{mca_layer.1} parent=0 // loop_footer_branch
    %9 = sbr.rel target = $region3
  $region8: #{mca_layer.1} parent=0 // loop_exit
    _

</llo_original>
